<compile_context>
chip_gen: v5e
topology: v5e:2x2
jax: 0.10.0
libtpu: 0.0.40
codegen_flags: <defaults>
</compile_context>

<pallas_src>
import jax
import jax.numpy as jnp
from jax.experimental import pallas as pl
from jax.experimental.pallas import tpu as pltpu


# ------------------------------ helpers -------------------------------------
def _cdiv(a, b):
    return -(-a // b)


def _round_up(x, m):
    return _cdiv(x, m) * m


def _pad_to(a, shape):
    pads = [(0, s - d) for d, s in zip(a.shape, shape)]
    if all(p == (0, 0) for p in pads):
        return a
    return jnp.pad(a, pads)


def _vmem_caps():
    """(vmem_limit_bytes to request, byte budget to size tiles against)."""
    try:
        phys = int(getattr(pltpu.get_tpu_info(), "vmem_capacity_bytes", 64 << 20))
    except Exception:  # conservative: v7x per-TC VMEM
        phys = 64 << 20
    limit = int(phys * 0.75)      # e.g. ~48 MiB on v7x, ~96 MiB on v5e/v6e
    budget = int(limit * 0.8)     # headroom for compiler temporaries
    return limit, budget


# ----------------------------- linear path ----------------------------------
def _linear_kernel_f32out(x_ref, wt_ref, b_ref, o_ref):
    # f32 output: accumulate directly into the (resident) output block.
    @pl.when(pl.program_id(2) == 0)
    def _():
        o_ref[...] = jnp.broadcast_to(b_ref[...], o_ref.shape)

    o_ref[...] += jnp.dot(x_ref[...], wt_ref[...],
                          preferred_element_type=jnp.float32)


def _linear_kernel_scratch(x_ref, wt_ref, b_ref, o_ref, acc_ref):
    # Narrow output dtype: accumulate in an f32 VMEM scratch, cast at the end.
    @pl.when(pl.program_id(2) == 0)
    def _():
        acc_ref[...] = jnp.zeros_like(acc_ref)

    acc_ref[...] += jnp.dot(x_ref[...], wt_ref[...],
                            preferred_element_type=jnp.float32)

    @pl.when(pl.program_id(2) == pl.num_programs(2) - 1)
    def _():
        o_ref[...] = (acc_ref[...] + b_ref[...]).astype(o_ref.dtype)


def embed_linear(x, weight, bias, *, compute_dtype=None):
    """x: (B, T, D_in); weight: (D_out, D_in) [PyTorch layout]; bias: (D_out,)."""
    B, T, D_in = x.shape
    D_out = weight.shape[0]
    M = B * T
    out_dtype = x.dtype
    if compute_dtype is not None:
        x = x.astype(compute_dtype)
    cdtype = x.dtype
    xbytes = jnp.dtype(cdtype).itemsize
    obytes = jnp.dtype(out_dtype).itemsize
    sub = 8 if xbytes >= 4 else 16          # sublane multiple (bf16 packs 16)

    limit, budget = _vmem_caps()

    # ---- tile selection: balanced blocks, lane-dense N, VMEM-budgeted ----
    tm_cap, tn_cap, tk_cap = 512, 1024, 1024
    while True:
        gm = max(1, _cdiv(M, tm_cap))
        tm = _round_up(_cdiv(M, gm), sub)
        Np = _round_up(D_out, 128)
        if Np <= tn_cap:
            tn, gn = Np, 1
        else:
            gn = _cdiv(Np, tn_cap)
            tn = _round_up(_cdiv(Np, gn), 128)
            Np = gn * tn
        if D_in <= tk_cap:
            tk, gk, Kp = D_in, 1, D_in
        else:
            gk = _cdiv(D_in, tk_cap)
            tk = _round_up(_cdiv(D_in, gk), 128)
            Kp = gk * tk
        ws = (2 * tm * tk * xbytes          # x block (double buffered)
              + 2 * tk * tn * xbytes        # weight block
              + 2 * tm * tn * obytes        # output block
              + 2 * tn * 4                  # bias block
              + 2 * tm * tn * 4)            # f32 accumulator + temp headroom
        if ws <= budget or (tm_cap <= 64 and tn_cap <= 128 and tk_cap <= 128):
            break
        if tk_cap > 256:
            tk_cap //= 2
        elif tn_cap > 128:
            tn_cap //= 2
        else:
            tm_cap = max(64, tm_cap // 2)

    # v7x has 2 TensorCores: prefer an even number of parallel (i, j) steps.
    if (gm * gn) % 2 == 1 and M > sub:
        cand_gm = gm + 1
        cand_tm = _round_up(_cdiv(M, cand_gm), sub)
        if M > (cand_gm - 1) * cand_tm:      # last block still has real rows
            gm, tm = cand_gm, cand_tm
    Mp = gm * tm

    x2d = x.reshape(M, D_in)
    if (Mp, Kp) != (M, D_in):
        x2d = _pad_to(x2d, (Mp, Kp))
    # TODO(synk): weight transpose + pad is a per-call HBM copy; hoist/cache it
    # outside the hot path when the same Embed weights are reused.
    wt = _pad_to(weight.T.astype(cdtype), (Kp, Np))
    b2 = _pad_to(bias.reshape(1, D_out).astype(jnp.float32), (1, Np))

    vmem_limit = int(min(max(2 * ws, 32 << 20), limit))

    if out_dtype == jnp.float32:
        kernel, scratch = _linear_kernel_f32out, []
    else:
        kernel, scratch = _linear_kernel_scratch, [pltpu.VMEM((tm, tn), jnp.float32)]

    out = pl.pallas_call(
        kernel,
        out_shape=jax.ShapeDtypeStruct((Mp, Np), out_dtype),
        grid=(gm, gn, gk),
        in_specs=[
            pl.BlockSpec((tm, tk), lambda i, j, k: (i, k)),
            pl.BlockSpec((tk, tn), lambda i, j, k: (k, j)),
            pl.BlockSpec((1, tn), lambda i, j, k: (0, j)),
        ],
        out_specs=pl.BlockSpec((tm, tn), lambda i, j, k: (i, j)),
        scratch_shapes=scratch,
        compiler_params=pltpu.CompilerParams(
            dimension_semantics=("parallel", "parallel", "arbitrary"),
            vmem_limit_bytes=vmem_limit),
    )(x2d, wt, b2)

    if (Mp, Np) != (M, D_out):
        out = out[:M, :D_out]
    return out.reshape(B, T, D_out)


# ------------------------------ conv path -----------------------------------
def _conv1d_kernel(x_ref, w_ref, b_ref, o_ref):
    # x_ref: (Bb, Tp, D_in)   input slab (full, replicate-padded sequences)
    # w_ref: (3, D_in, tn)    per-tap weights (already transposed)
    # b_ref: (1, tn)          f32 bias
    # o_ref: (Bb, Tp, tn)
    Bb, Tp, D_in = x_ref.shape
    tn = o_ref.shape[-1]

    # One big-M slab feeds all three taps (M = Bb*Tp rows on the MXU).
    x2 = x_ref[...].reshape(Bb * Tp, D_in)

    # center tap (k=1): y[t] += x[t] @ W1
    acc = jnp.dot(x2, w_ref[1],
                  preferred_element_type=jnp.float32).reshape(Bb, Tp, tn)

    t_idx = jax.lax.broadcasted_iota(jnp.int32, (1, Tp, 1), 1)

    # left tap (k=0): y[t] += x[t-1] @ W0, with x[-1] := x[0] (replicate).
    # roll is an XLU sublane rotation; fix the wrapped t=0 row with a select.
    z0 = jnp.dot(x2, w_ref[0],
                 preferred_element_type=jnp.float32).reshape(Bb, Tp, tn)
    z0s = pltpu.roll(z0, shift=1, axis=1)            # z0s[t] = z0[t-1]
    acc = acc + jnp.where(t_idx == 0, z0[:, :1, :], z0s)

    # right tap (k=2): y[t] += x[t+1] @ W2, with x[T] := x[T-1] (replicate).
    z2 = jnp.dot(x2, w_ref[2],
                 preferred_element_type=jnp.float32).reshape(Bb, Tp, tn)
    z2s = pltpu.roll(z2, shift=Tp - 1, axis=1)       # z2s[t] = z2[t+1]
    acc = acc + jnp.where(t_idx == Tp - 1, z2[:, Tp - 1:Tp, :], z2s)

    o_ref[...] = (acc + b_ref[...]).astype(o_ref.dtype)


def embed_conv(x, weight, bias, *, compute_dtype=None, target_rows=1024):
    """x: (B, T, D_in); weight: (D_out, D_in, 3) [PyTorch Conv1d]; bias: (D_out,)."""
    B, T, D_in = x.shape
    D_out = weight.shape[0]
    out_dtype = x.dtype
    if compute_dtype is not None:
        x = x.astype(compute_dtype)
    cdtype = x.dtype
    xbytes = jnp.dtype(cdtype).itemsize
    obytes = jnp.dtype(out_dtype).itemsize
    sub = 8 if xbytes >= 4 else 16

    limit, budget = _vmem_caps()

    # Pad T to a sublane multiple by replicating the last time step.  Rows
    # t < T are unchanged by replicate padding; padded rows are sliced off.
    Tp = _round_up(T, sub)
    if Tp != T:
        x = jnp.concatenate(
            [x, jnp.broadcast_to(x[:, T - 1:T, :], (B, Tp - T, D_in))], axis=1)

    Np0 = _round_up(D_out, 128)

    def pick_n(cap):
        if Np0 <= cap:
            return Np0, 1, Np0
        gn_ = _cdiv(Np0, cap)
        tn_ = _round_up(_cdiv(Np0, gn_), 128)
        return tn_, gn_, gn_ * tn_

    def conv_ws(bb_, tn_):
        rows = bb_ * Tp
        return (2 * rows * D_in * xbytes        # x block (double buffered)
                + 2 * 3 * D_in * tn_ * xbytes   # weight block
                + 2 * rows * tn_ * obytes       # output block
                + 2 * tn_ * 4                   # bias block
                + rows * D_in * xbytes          # x2 reshape temporary
                + 4 * rows * tn_ * 4)           # acc / per-tap / rolled f32 temps

    # Widest possible tn first (weights resident, x streamed exactly once),
    # then shrink bb, then narrow tn — honest VMEM accounting throughout.
    bb = max(1, min(B, target_rows // Tp))
    tn, gn, Np = pick_n(2048)
    while bb > 1 and conv_ws(bb, tn) > budget:
        bb = max(1, bb // 2)
    for cap in (2048, 1024, 512, 256, 128):
        tn, gn, Np = pick_n(cap)
        if conv_ws(bb, tn) <= budget:
            break
    # TODO(synk): for very long T where even (bb=1, tn=128) exceeds the scoped
    # VMEM budget, additionally tile the time axis with a 1-row halo.

    # Batch is padded (no "bb divides B" requirement).  v7x has 2 TCs: prefer
    # an even number of parallel grid steps when that doesn't add an empty block.
    gb = _cdiv(B, bb)
    if (gb * gn) % 2 == 1 and B > 1:
        cand_gb = gb + 1
        cand_bb = _cdiv(B, cand_gb)
        if B > (cand_gb - 1) * cand_bb:
            gb, bb = cand_gb, cand_bb
    Bp = gb * bb
    if Bp != B:
        x = jnp.pad(x, ((0, Bp - B), (0, 0), (0, 0)))

    # TODO(synk): weight transpose + pad is a per-call HBM copy; hoist/cache it
    # outside the hot path when the same Embed weights are reused.
    w = _pad_to(jnp.transpose(weight, (2, 1, 0)).astype(cdtype), (3, D_in, Np))
    b2 = _pad_to(bias.reshape(1, D_out).astype(jnp.float32), (1, Np))

    vmem_limit = int(min(max(2 * conv_ws(bb, tn), 32 << 20), limit))

    out = pl.pallas_call(
        _conv1d_kernel,
        out_shape=jax.ShapeDtypeStruct((Bp, Tp, Np), out_dtype),
        grid=(gb, gn),
        in_specs=[
            pl.BlockSpec((bb, Tp, D_in), lambda i, j: (i, 0, 0)),
            pl.BlockSpec((3, D_in, tn), lambda i, j: (0, 0, j)),
            pl.BlockSpec((1, tn), lambda i, j: (0, j)),
        ],
        out_specs=pl.BlockSpec((bb, Tp, tn), lambda i, j: (i, 0, j)),
        compiler_params=pltpu.CompilerParams(
            dimension_semantics=("parallel", "parallel"),
            vmem_limit_bytes=vmem_limit),
    )(x, w, b2)

    if (Bp, Tp, Np) == (B, T, D_out):
        return out
    return out[:B, :T, :D_out]


# ------------------------------ reference -----------------------------------
def _ref_linear(x, weight, bias):
    return jnp.einsum("btd,od->bto", x, weight) + bias


def _ref_conv(x, weight, bias):
    x_pad = jnp.concatenate([x[:, :1, :], x, x[:, -1:, :]], axis=1)
    T = x.shape[1]
    out = jnp.zeros((x.shape[0], T, weight.shape[0]), jnp.float32)
    for k in range(3):
        out = out + jnp.einsum("btd,od->bto", x_pad[:, k:k + T, :], weight[:, :, k])
    return out + bias


# --------------------------------- main -------------------------------------
if __name__ == "__main__":
    key = jax.random.PRNGKey(0)
    k_x, k_wl, k_bl, k_wc, k_bc, k_x2 = jax.random.split(key, 6)

    # small shapes consistent with the module (B, T, D_in) -> (B, T, D_out)
    B, T, D_in, D_out = 2, 8, 32, 32
    x = jax.random.normal(k_x, (B, T, D_in), dtype=jnp.float32)
    w_lin = jax.random.normal(k_wl, (D_out, D_in), dtype=jnp.float32) * 0.05
    b_lin = jax.random.normal(k_bl, (D_out,), dtype=jnp.float32) * 0.05
    w_conv = jax.random.normal(k_wc, (D_out, D_in, 3), dtype=jnp.float32) * 0.05
    b_conv = jax.random.normal(k_bc, (D_out,), dtype=jnp.float32) * 0.05

    # proj='linear'
    y_lin = embed_linear(x, w_lin, b_lin)
    jax.block_until_ready(y_lin)
    assert y_lin.shape == (B, T, D_out)
    assert jnp.allclose(y_lin, _ref_linear(x, w_lin, b_lin), atol=1e-4, rtol=1e-4)

    # proj='conv'
    y_conv = embed_conv(x, w_conv, b_conv)
    jax.block_until_ready(y_conv)
    assert y_conv.shape == (B, T, D_out)
    assert jnp.allclose(y_conv, _ref_conv(x, w_conv, b_conv), atol=1e-4, rtol=1e-4)

    # larger, unaligned shapes: exercise padding, multi-block grids, even split
    B2, T2, Di2, Do2 = 4, 20, 96, 320
    x2 = jax.random.normal(k_x2, (B2, T2, Di2), dtype=jnp.float32)
    w_lin2 = jax.random.normal(k_wl, (Do2, Di2), dtype=jnp.float32) * 0.05
    b_lin2 = jax.random.normal(k_bl, (Do2,), dtype=jnp.float32) * 0.05
    w_conv2 = jax.random.normal(k_wc, (Do2, Di2, 3), dtype=jnp.float32) * 0.05
    b_conv2 = jax.random.normal(k_bc, (Do2,), dtype=jnp.float32) * 0.05

    y_lin2 = embed_linear(x2, w_lin2, b_lin2)
    jax.block_until_ready(y_lin2)
    assert y_lin2.shape == (B2, T2, Do2)
    assert jnp.allclose(y_lin2, _ref_linear(x2, w_lin2, b_lin2), atol=1e-4, rtol=1e-4)

    y_conv2 = embed_conv(x2, w_conv2, b_conv2)
    jax.block_until_ready(y_conv2)
    assert y_conv2.shape == (B2, T2, Do2)
    assert jnp.allclose(y_conv2, _ref_conv(x2, w_conv2, b_conv2), atol=1e-4, rtol=1e-4)

    # opt-in bf16 compute path (MXU-native); f32 accumulation, looser tolerance
    y_lin_bf16 = embed_linear(x2, w_lin2, b_lin2, compute_dtype=jnp.bfloat16)
    jax.block_until_ready(y_lin_bf16)
    assert y_lin_bf16.shape == (B2, T2, Do2)
    assert jnp.allclose(y_lin_bf16, _ref_linear(x2, w_lin2, b_lin2),
                        atol=1e-1, rtol=1e-1)

    print("KERNEL_OK")
</pallas_src>

<mosaic_0001>
module attributes {stable_mosaic.version = 11 : i64} {
  func.func @_linear_kernel_f32out(%arg0: i32, %arg1: i32, %arg2: i32, %arg3: memref<8x32xf32, #tpu.memory_space<vmem>>, %arg4: memref<32x128xf32, #tpu.memory_space<vmem>>, %arg5: memref<1x128xf32, #tpu.memory_space<vmem>>, %arg6: memref<8x128xf32, #tpu.memory_space<vmem>>) attributes {dimension_semantics = [#tpu.dimension_semantics<parallel>, #tpu.dimension_semantics<parallel>, #tpu.dimension_semantics<arbitrary>], iteration_bounds = array<i64: 2, 1, 1>, scalar_prefetch = 0 : i64, scratch_operands = 0 : i64, tpu.core_type = #tpu.core_type<tc>, window_params = [{transform_indices = @transform_0, window_bounds = array<i64: 8, 32>}, {transform_indices = @transform_1, window_bounds = array<i64: 32, 128>}, {transform_indices = @transform_2, window_bounds = array<i64: 1, 128>}, {transform_indices = @transform_3, window_bounds = array<i64: 8, 128>}]} {
    %c0_i32 = arith.constant 0 : i32
    %0 = arith.cmpi eq, %arg2, %c0_i32 : i32
    %1 = arith.extui %0 : i1 to i32
    %c0_i32_0 = arith.constant 0 : i32
    %2 = arith.cmpi ne, %1, %c0_i32_0 : i32
    scf.if %2 {
      %c0_8 = arith.constant 0 : index
      %c0_9 = arith.constant 0 : index
      %9 = vector.load %arg5[%c0_8, %c0_9] : memref<1x128xf32, #tpu.memory_space<vmem>>, vector<1x128xf32>
      %10 = vector.shape_cast %9 : vector<1x128xf32> to vector<1x128xf32>
      %11 = vector.broadcast %10 : vector<1x128xf32> to vector<8x128xf32>
      %c0_10 = arith.constant 0 : index
      %c0_11 = arith.constant 0 : index
      %12 = vector.load %arg6[%c0_10, %c0_11] : memref<8x128xf32, #tpu.memory_space<vmem>>, vector<8x128xf32>
      tpu.vector_store %arg6[%c0_10, %c0_11], %11 {strides = array<i32>} : memref<8x128xf32, #tpu.memory_space<vmem>>, vector<8x128xf32>,
    } else {
    }
    %c0 = arith.constant 0 : index
    %c0_1 = arith.constant 0 : index
    %3 = vector.load %arg6[%c0, %c0_1] : memref<8x128xf32, #tpu.memory_space<vmem>>, vector<8x128xf32>
    %c0_2 = arith.constant 0 : index
    %c0_3 = arith.constant 0 : index
    %4 = vector.load %arg3[%c0_2, %c0_3] : memref<8x32xf32, #tpu.memory_space<vmem>>, vector<8x32xf32>
    %c0_4 = arith.constant 0 : index
    %c0_5 = arith.constant 0 : index
    %5 = vector.load %arg4[%c0_4, %c0_5] : memref<32x128xf32, #tpu.memory_space<vmem>>, vector<32x128xf32>
    %cst = arith.constant dense<0.000000e+00> : vector<8x128xf32>
    %6 = tpu.matmul %4, %5, %cst {dimension_numbers = #tpu.dot_dimension_numbers<[1], [0], [0], [1], [0, 0, 1, 1], [], []>} : vector<8x32xf32>, vector<32x128xf32>, vector<8x128xf32> -> vector<8x128xf32>
    %7 = arith.addf %3, %6 : vector<8x128xf32>
    %c0_6 = arith.constant 0 : index
    %c0_7 = arith.constant 0 : index
    %8 = vector.load %arg6[%c0_6, %c0_7] : memref<8x128xf32, #tpu.memory_space<vmem>>, vector<8x128xf32>
    tpu.vector_store %arg6[%c0_6, %c0_7], %7 {strides = array<i32>} : memref<8x128xf32, #tpu.memory_space<vmem>>, vector<8x128xf32>,
    return
  }
  func.func @transform_0(%arg0: i32, %arg1: i32, %arg2: i32) -> (i32, i32) {
    %c0_i32 = arith.constant 0 : i32
    return %arg0, %arg2 : i32, i32
  }
  func.func @transform_1(%arg0: i32, %arg1: i32, %arg2: i32) -> (i32, i32) {
    %c0_i32 = arith.constant 0 : i32
    return %arg2, %arg1 : i32, i32
  }
  func.func @transform_2(%arg0: i32, %arg1: i32, %arg2: i32) -> (i32, i32) {
    %c0_i32 = arith.constant 0 : i32
    %c0_i32_0 = arith.constant 0 : i32
    return %c0_i32, %arg1 : i32, i32
  }
  func.func @transform_3(%arg0: i32, %arg1: i32, %arg2: i32) -> (i32, i32) {
    %c0_i32 = arith.constant 0 : i32
    return %arg0, %arg1 : i32, i32
  }
}

</mosaic_0001>

<llo_original>
// kernel: tpu_custom_call.1
$region0: #{tpu_custom_call.1}
  #allocation0 [shape = 'u32[]', space=smem, size = 0x4, offset = 0x4, fixed_abs, tag = 'smem constant byte address 0x4 - core index']
  #allocation1 [shape = 'u32[72,128]{1,0:T(1,128)}', space=vmem, size = 0x9000, scoped, tag = 'internal scratch']
  %s0 = inlined_call_operand.hbm [shape: f32[16,32], index: 0, kind: input, shape index: {}]
  %s1 = inlined_call_operand.hbm [shape: f32[32,128], index: 1, kind: input, shape index: {}]
  %s2 = inlined_call_operand.vmem [shape: f32[1,128], index: 2, kind: input, shape index: {}]
  %s3 = inlined_call_operand.hbm [shape: f32[16,128], index: 3, kind: output, shape index: {}]
  %s4 = sld [smem:[#allocation0]]
  $region57: #{tpu_custom_call.1} parent=0
    _
  %s6 = ssub.s32 1, %s4
  %s7 = scalar_select 0, %s6, %s4
  $region1: #{tpu_custom_call.1} parent=0
    #allocation2 [shape = 'u8[8192]{0}', space=vmem, size = 0x2000, scoped, tag = 'input window, operand 0']
    #allocation3 [shape = 's32[2]{0}', space=sflag, size = 0x8, scoped, tag = 'scoped memory for tpu_custom_call.1']
    #allocation4 [shape = 's32[2]{0}', space=sflag, size = 0x8, scoped, tag = 'scoped memory for tpu_custom_call.1']
    #allocation5 [shape = 'u8[16384]{0}', space=vmem, size = 0x4000, scoped, tag = 'input window, operand 1, single buffered']
    #allocation6 [shape = 's32[1]{0}', space=sflag, size = 0x4, scoped, tag = 'scoped memory for tpu_custom_call.1']
    #allocation7 [shape = 'u8[8192]{0}', space=vmem, size = 0x2000, scoped, tag = 'output window, operand 0']
    %8 = vsyncpa [#allocation3], 0
    %s9 = scalar_lea.sflag [#allocation3], 1
    %10 = vsyncpa %s9, 0
    %11 = vsyncpa [#allocation6], 0
    %12 = vsyncpa [#allocation4], 0
    %s13 = scalar_lea.sflag [#allocation4], 1
    %14 = vsyncpa %s13, 0
    loop: start=0, step=1, limit=4
    $region2: #{tpu_custom_call.1} parent=1 // loop_pre_header
      _
    $region3: #{tpu_custom_call.1} parent=1 // loop_header
      %s16 = sphi 0, %s20
      %p17 = scmp.ge.s32.totalorder %s16, 4
      %s23 = sphi 0, %s42
      %s24 = sphi 0, %s38
      %s25 = sphi 0, %s34
      %s26 = sphi 0, %s23
      %s27 = sphi 0, %s24
      %s28 = sphi 0, %s25
      %s29 = sphi 0, %s26
      %s30 = sphi 0, %s27
      %s31 = sphi 0, %s28
      %s47 = sphi 0, %s49
      %s50 = sphi 0, %s47
      %s51 = sphi 0, %s50
      %s67 = sphi 0, %s51
      %s75 = sphi 0, %s77
      %s78 = sphi 0, %s75
      %s79 = sphi 0, %s78
      %s95 = sphi 0, %s79
      %s101 = sphi 0, %s103
      %s104 = sphi 0, %s101
      %s105 = sphi 0, %s104
      %s121 = sphi 0, %s105
      %s129 = sphi 0, %s131
      %s132 = sphi 0, %s129
      %s133 = sphi 0, %s132
      %s149 = sphi 0, %s133
    $region4: #{tpu_custom_call.1} parent=1 // loop_header_branch
      %19 = sbr.rel (%p17) target = $region8
    $region5: #{tpu_custom_call.1} parent=1 // loop_body
      %s21 = ssub.s32 %s16, 1
      %s22 = ssub.s32 %s16, 2
      %s32 = sadd.s32 1, %s25
      %p33 = scmp.ge.s32.totalorder %s32, 1
      %s34 = scalar_select %p33, 0, %s32
      %s35 = sadd.s32 1, %s24
      %s36 = scalar_select %p33, %s35, %s24
      %p37 = scmp.ge.s32.totalorder %s36, 1
      %s38 = scalar_select %p37, 0, %s36
      %s39 = sadd.s32 1, %s23
      %s40 = scalar_select %p37, %s39, %s23
      %p41 = scmp.ge.s32.totalorder %s40, 2
      %s42 = scalar_select %p41, 0, %s40
      %s43 = ssub.s32 %s23, %s42
      %s44 = ssub.s32 %s25, %s34
      %s45 = sor.u32 %s43, %s44
      %p46 = scmp.eq.s32.totalorder %s45, 0
      %s48 = sadd.s32 %s47, 1
      %s49 = scalar_select %p46, %s47, %s48
      %p52 = pneg %p46
      %p53 = scmp.eq.s32.totalorder %s16, 1
      %p54 = por %p52, %p53
      %p55 = scmp.ne.s32.totalorder %s47, %s50
      %p56 = scmp.eq.s32.totalorder %s16, 0
      %p57 = por %p55, %p56
      %p58 = scmp.ne.s32.totalorder %s47, %s50
      %p59 = scmp.eq.s32.totalorder %s21, 1
      %p60 = por %p58, %p59
      %p61 = scmp.ne.s32.totalorder %s50, %s51
      %p62 = scmp.eq.s32.totalorder %s21, 0
      %p63 = por %p61, %p62
      %p64 = scmp.ne.s32.totalorder %s50, %s51
      %p65 = scmp.eq.s32.totalorder %s22, 1
      %p66 = por %p64, %p65
      %p68 = scmp.ne.s32.totalorder %s51, %s67
      %p69 = scmp.eq.s32.totalorder %s22, 0
      %p70 = por %p68, %p69
      %s71 = ssub.s32 %s25, %s34
      %s72 = ssub.s32 %s24, %s38
      %s73 = sor.u32 %s71, %s72
      %p74 = scmp.eq.s32.totalorder %s73, 0
      %s76 = sadd.s32 %s75, 1
      %s77 = scalar_select %p74, %s75, %s76
      %p80 = pneg %p74
      %p81 = scmp.eq.s32.totalorder %s16, 1
      %p82 = por %p80, %p81
      %p83 = scmp.ne.s32.totalorder %s75, %s78
      %p84 = scmp.eq.s32.totalorder %s16, 0
      %p85 = por %p83, %p84
      %p86 = scmp.ne.s32.totalorder %s75, %s78
      %p87 = scmp.eq.s32.totalorder %s21, 1
      %p88 = por %p86, %p87
      %p89 = scmp.ne.s32.totalorder %s78, %s79
      %p90 = scmp.eq.s32.totalorder %s21, 0
      %p91 = por %p89, %p90
      %p92 = scmp.ne.s32.totalorder %s78, %s79
      %p93 = scmp.eq.s32.totalorder %s22, 1
      %p94 = por %p92, %p93
      %p96 = scmp.ne.s32.totalorder %s79, %s95
      %p97 = scmp.eq.s32.totalorder %s22, 0
      %p98 = por %p96, %p97
      %s99 = ssub.s32 %s24, %s38
      %p100 = scmp.eq.s32.totalorder %s99, 0
      %s102 = sadd.s32 %s101, 1
      %s103 = scalar_select %p100, %s101, %s102
      %p106 = pneg %p100
      %p107 = scmp.eq.s32.totalorder %s16, 1
      %p108 = por %p106, %p107
      %p109 = scmp.ne.s32.totalorder %s101, %s104
      %p110 = scmp.eq.s32.totalorder %s16, 0
      %p111 = por %p109, %p110
      %p112 = scmp.ne.s32.totalorder %s101, %s104
      %p113 = scmp.eq.s32.totalorder %s21, 1
      %p114 = por %p112, %p113
      %p115 = scmp.ne.s32.totalorder %s104, %s105
      %p116 = scmp.eq.s32.totalorder %s21, 0
      %p117 = por %p115, %p116
      %p118 = scmp.ne.s32.totalorder %s104, %s105
      %p119 = scmp.eq.s32.totalorder %s22, 1
      %p120 = por %p118, %p119
      %p122 = scmp.ne.s32.totalorder %s105, %s121
      %p123 = scmp.eq.s32.totalorder %s22, 0
      %p124 = por %p122, %p123
      %s125 = ssub.s32 %s23, %s42
      %s126 = ssub.s32 %s24, %s38
      %s127 = sor.u32 %s125, %s126
      %p128 = scmp.eq.s32.totalorder %s127, 0
      %s130 = sadd.s32 %s129, 1
      %s131 = scalar_select %p128, %s129, %s130
      %p134 = pneg %p128
      %p135 = scmp.eq.s32.totalorder %s16, 1
      %p136 = por %p134, %p135
      %p137 = scmp.ne.s32.totalorder %s129, %s132
      %p138 = scmp.eq.s32.totalorder %s16, 0
      %p139 = por %p137, %p138
      %p140 = scmp.ne.s32.totalorder %s129, %s132
      %p141 = scmp.eq.s32.totalorder %s21, 1
      %p142 = por %p140, %p141
      %p143 = scmp.ne.s32.totalorder %s132, %s133
      %p144 = scmp.eq.s32.totalorder %s21, 0
      %p145 = por %p143, %p144
      %p146 = scmp.ne.s32.totalorder %s132, %s133
      %p147 = scmp.eq.s32.totalorder %s22, 1
      %p148 = por %p146, %p147
      %p150 = scmp.ne.s32.totalorder %s133, %s149
      %p151 = scmp.eq.s32.totalorder %s22, 0
      %p152 = por %p150, %p151
      %p153 = scmp.le.s32.totalorder 1, %s16
      %p154 = scmp.lt.s32.totalorder %s16, 3
      %p155 = pnand %p153, %p154
      %p156 = pneg %p155
      // Predicated region
      $region9: #{tpu_custom_call.1} parent=5 // pred_check
        _
      $region10: #{tpu_custom_call.1} parent=5 // pred_check_branch
        %158 = sbr.rel (%p155) target = $region12
      $region11: #{tpu_custom_call.1} parent=5 // pred_region
        %s159 = ssub.s32 %s16, 1
        // Predicated region
        $region13: #{tpu_custom_call.1} parent=11 // pred_check
          %p160 = pneg %p91
        $region14: #{tpu_custom_call.1} parent=11 // pred_check_branch
          %162 = sbr.rel (%p160) target = $region16
        $region15: #{tpu_custom_call.1} parent=11 // pred_region
          %s163 = smul.u32 4, %s28
          %165 = vsyncadd [#allocation6], 0
          %s166 = sadd.s32 %s27, %s163
          %s167 = smul.addr %s166, 8
          %s168 = scalar_lea.hbm %s1, %s167
          %s169 = sshll.u32 %s168, 4
          %s170 = int_to_ptr.hbm [resolvable:$true] %s169
          %s171 = sshll.u32 [#allocation5], 4
          %s172 = int_to_ptr.vmem [resolvable:$true] %s171
          %177 = dma.hbm_to_vmem [thread:$0]  %s170, 512, %s172, [#allocation6], 128, 128, 8
        $region16: #{tpu_custom_call.1} parent=11 // pred_fallthru
          _
        // Predicated region
        $region17: #{tpu_custom_call.1} parent=11 // pred_check
          %p178 = pneg %p117
        $region18: #{tpu_custom_call.1} parent=11 // pred_check_branch
          %180 = sbr.rel (%p178) target = $region20
        $region19: #{tpu_custom_call.1} parent=11 // pred_region
          %p181 = scmp.lt.s32.totalorder %s27, 0
          %s182 = scalar_select %p181, %s27, 0
          %s183 = scalar_lea.vmem %s2, %s182
        $region20: #{tpu_custom_call.1} parent=11 // pred_fallthru
          _
      $region12: #{tpu_custom_call.1} parent=5 // pred_fallthru
        _
      %p184 = scmp.lt.s32.totalorder %s16, 2
      // Predicated region
      $region21: #{tpu_custom_call.1} parent=5 // pred_check
        %p185 = pneg %p184
      $region22: #{tpu_custom_call.1} parent=5 // pred_check_branch
        %187 = sbr.rel (%p185) target = $region24
      $region23: #{tpu_custom_call.1} parent=5 // pred_region
        // Predicated region
        $region25: #{tpu_custom_call.1} parent=23 // pred_check
          %p188 = pneg %p57
        $region26: #{tpu_custom_call.1} parent=23 // pred_check_branch
          %190 = sbr.rel (%p188) target = $region28
        $region27: #{tpu_custom_call.1} parent=23 // pred_region
          %s191 = sand.u32 %s47, 1
          %s192 = scalar_lea.sflag [#allocation3], %s191
          %s193 = sand.u32 %s47, 1
          %s194 = smul.addr %s193, 8
          %s195 = scalar_lea.vmem [#allocation2], %s194
          %197 = vsyncadd %s192, 0
          %s198 = sadd.s32 %s25, %s23
          %s199 = smul.addr %s198, 8
          %s200 = scalar_lea.hbm %s0, %s199
          %s202 = sshll.u32 %s200, 4
          %s203 = int_to_ptr.hbm [resolvable:$true] %s202
          %s204 = sshll.u32 %s195, 4
          %s205 = int_to_ptr.vmem [resolvable:$true] %s204
          %207 = dma.hbm_to_vmem [thread:$0]  %s203, 128, %s205, %s192
        $region28: #{tpu_custom_call.1} parent=23 // pred_fallthru
          _
      $region24: #{tpu_custom_call.1} parent=5 // pred_fallthru
        _
      %p208 = scmp.le.s32.totalorder 1, %s16
      %p209 = scmp.lt.s32.totalorder %s16, 3
      %p210 = pnand %p208, %p209
      %p211 = pneg %p210
      // Predicated region
      $region29: #{tpu_custom_call.1} parent=5 // pred_check
        _
      $region30: #{tpu_custom_call.1} parent=5 // pred_check_branch
        %213 = sbr.rel (%p210) target = $region32
      $region31: #{tpu_custom_call.1} parent=5 // pred_region
        %s214 = ssub.s32 %s16, 1
        %s215 = sand.u32 %s50, 1
        %s216 = scalar_lea.sflag [#allocation3], %s215
        %s217 = sand.u32 %s50, 1
        %s218 = smul.addr %s217, 8
        %s219 = scalar_lea.vmem [#allocation2], %s218
        // Predicated region
        $region33: #{tpu_custom_call.1} parent=31 // pred_check
          %p220 = pneg %p63
        $region34: #{tpu_custom_call.1} parent=31 // pred_check_branch
          %222 = sbr.rel (%p220) target = $region36
        $region35: #{tpu_custom_call.1} parent=31 // pred_region
          %224 = dma.done %s216, 128
        $region36: #{tpu_custom_call.1} parent=31 // pred_fallthru
          _
        // Predicated region
        $region37: #{tpu_custom_call.1} parent=31 // pred_check
          %p225 = pneg %p91
        $region38: #{tpu_custom_call.1} parent=31 // pred_check_branch
          %227 = sbr.rel (%p225) target = $region40
        $region39: #{tpu_custom_call.1} parent=31 // pred_region
          %229 = dma.done [#allocation6], 512
        $region40: #{tpu_custom_call.1} parent=31 // pred_fallthru
          _
        %s230 = sand.u32 %s50, 1
        %s231 = scalar_lea.sflag [#allocation3], %s230
        %s232 = sand.u32 %s50, 1
        %s233 = smul.addr %s232, 8
        %s234 = scalar_lea.vmem [#allocation2], %s233
        %p235 = pneg %p63
        %p236 = pneg %p60
        %p237 = pneg %p91
        %p238 = pneg %p88
        %p239 = scmp.lt.s32.totalorder %s27, 0
        %s240 = scalar_select %p239, %s27, 0
        %s241 = scalar_lea.vmem %s2, %s240
        %p242 = pneg %p117
        %p243 = pneg %p114
        %p244 = pneg %p145
        %p245 = pneg %p142
        %s246 = sand.u32 %s132, 1
        %s247 = scalar_lea.sflag [#allocation4], %s246
        %s248 = sand.u32 %s132, 1
        %s249 = smul.addr %s248, 8
        %s250 = scalar_lea.vmem [#allocation7], %s249
        %s251 = smul.u32 4, %s28
        %p252 = scmp.lt.s32.totalorder %s27, 0
        %s253 = scalar_select %p252, %s27, 0
        %s254 = scalar_lea.vmem %s2, %s253
        %p255 = scmp.eq.s32.totalorder %s28, 0
        // Predicated region
        $region41: #{tpu_custom_call.1} parent=31 // pred_check
          %p256 = pneg %p255
        $region42: #{tpu_custom_call.1} parent=31 // pred_check_branch
          %258 = sbr.rel (%p256) target = $region44
        $region43: #{tpu_custom_call.1} parent=31 // pred_region
          %v259 = vld [vmem:[%s254] sm:$0x1]
          %v261 = vperm.slane %v259, 0
          %263 = vst [vmem:[%s250] sm:$0xff] %v261
        $region44: #{tpu_custom_call.1} parent=31 // pred_fallthru
          _
        %v264 = vld [vmem:[%s250] sm:$0xff]
        %v265 = vld [vmem:[%s219] sm:$0xff]
        %v266 = vld [vmem:[#allocation5] sm:$0xff]
        %v267 = vld [vmem:[#allocation5 + $0x8] sm:$0xff]
        %v268 = vld [vmem:[#allocation5 + $0x10] sm:$0xff]
        %v269 = vld [vmem:[#allocation5 + $0x18] sm:$0xff]
        %vm270 = vcmask 261120
        %v272 = vsel %vm270, %v265, 0
        %274 = vmatpush.msra.mxu0 0.0
        %275 = vmatpush.msra.mxu0 0.0
        %276 = vmatpush.msra.mxu0 0.0
        %277 = vmatpush.msra.mxu0 0.0
        %278 = vmatpush.msra.mxu0 0.0
        %279 = vmatpush.msra.mxu0 0.0
        %280 = vmatpush.msra.mxu0 0.0
        %281 = vmatpush.msra.mxu0 0.0
        %282 = vmatpush.msra.mxu0 0.0
        %283 = vmatpush.msra.mxu0 0.0
        %284 = vmatpush.msra.mxu0 0.0
        %285 = vmatpush.msra.mxu0 0.0
        %286 = vmatpush.msra.mxu0 %v269
        %287 = vmatpush.msra.mxu0 %v268
        %288 = vmatpush.msra.mxu0 %v267
        %289 = vmatpush.msra.mxu0 %v266
        %290 = vmatmul.f32.gmra.mxu0 %v272
        %v291 = vpop.f32.mrf.mxu0
        %v292 = vadd.f32 0.0, %v291
        %293 = vdwg.mxu0
        %v294 = vadd.f32 %v264, %v292
        %295 = vst [vmem:[%s250] sm:$0xff] %v294
        %s296 = sand.u32 %s132, 1
        %s297 = scalar_lea.sflag [#allocation4], %s296
        %s298 = sand.u32 %s132, 1
        %s299 = smul.addr %s298, 8
        %s300 = scalar_lea.vmem [#allocation7], %s299
        // Predicated region
        $region45: #{tpu_custom_call.1} parent=31 // pred_check
          %p301 = pneg %p142
        $region46: #{tpu_custom_call.1} parent=31 // pred_check_branch
          %303 = sbr.rel (%p301) target = $region48
        $region47: #{tpu_custom_call.1} parent=31 // pred_region
          %305 = vsyncadd %s297, 0
          %s306 = sadd.s32 %s27, %s26
          %s307 = smul.addr %s306, 8
          %s308 = scalar_lea.hbm %s3, %s307
          %s310 = sshll.u32 %s300, 4
          %s311 = int_to_ptr.vmem [resolvable:$true] %s310
          %s312 = sshll.u32 %s308, 4
          %s313 = int_to_ptr.hbm [resolvable:$true] %s312
          %315 = dma.vmem_to_hbm [thread:$0]  %s311, 128, %s313, %s297
        $region48: #{tpu_custom_call.1} parent=31 // pred_fallthru
          _
      $region32: #{tpu_custom_call.1} parent=5 // pred_fallthru
        _
      %p316 = scmp.le.s32.totalorder 2, %s16
      // Predicated region
      $region49: #{tpu_custom_call.1} parent=5 // pred_check
        %p317 = pneg %p316
      $region50: #{tpu_custom_call.1} parent=5 // pred_check_branch
        %319 = sbr.rel (%p317) target = $region52
      $region51: #{tpu_custom_call.1} parent=5 // pred_region
        %s320 = ssub.s32 %s16, 2
        // Predicated region
        $region53: #{tpu_custom_call.1} parent=51 // pred_check
          %p321 = pneg %p148
        $region54: #{tpu_custom_call.1} parent=51 // pred_check_branch
          %323 = sbr.rel (%p321) target = $region56
        $region55: #{tpu_custom_call.1} parent=51 // pred_region
          %s324 = sand.u32 %s133, 1
          %s325 = scalar_lea.sflag [#allocation4], %s324
          %s326 = sand.u32 %s133, 1
          %s327 = smul.addr %s326, 8
          %s328 = scalar_lea.vmem [#allocation7], %s327
          %330 = dma.done %s325, 128
        $region56: #{tpu_custom_call.1} parent=51 // pred_fallthru
          _
      $region52: #{tpu_custom_call.1} parent=5 // pred_fallthru
        _
    $region6: #{tpu_custom_call.1} parent=1 // loop_footer
      %s20 = sadd.s32 1, %s16
    $region7: #{tpu_custom_call.1} parent=1 // loop_footer_branch
      %15 = sbr.rel target = $region3
    $region8: #{tpu_custom_call.1} parent=1 // loop_exit
      _
    %331 = vsyncpa [#allocation3], 1
    %s332 = scalar_lea.sflag [#allocation3], 1
    %333 = vsyncpa %s332, 1
    %334 = vsyncpa [#allocation6], 1
    %335 = vsyncpa [#allocation4], 1
    %s336 = scalar_lea.sflag [#allocation4], 1
    %337 = vsyncpa %s336, 1

</llo_original>
